<compile_context>
chip_gen: v5e
topology: v5e:2x2
jax: 0.10.0
libtpu: 0.0.40
codegen_flags: <defaults>
</compile_context>

<pallas_src>
import jax
import jax.numpy as jnp
from jax.experimental import pallas as pl
from jax.experimental.pallas import tpu as pltpu

# ---- model hyperparameters (match the PyTorch module config under test) ----
BATCH = 8
INPUT_SIZE = 32
HIDDEN_SIZE = 64
PROJECTION_SIZE = 32
GROUP_NORM_GROUPS = 4
USE_MLP_NORM = True
GN_EPS = 1e-5                                   # nn.GroupNorm default eps

# ---- lane packing: 4 logical rows per 128-lane slab -------------------------
_PACK = 128 // INPUT_SIZE                       # 4
assert 128 % INPUT_SIZE == 0 and (_PACK * PROJECTION_SIZE) % 128 == 0
_RD = _PACK * INPUT_SIZE                        # 128  packed input lanes
_RH = _PACK * HIDDEN_SIZE                       # 256  packed hidden lanes
_RP = _PACK * PROJECTION_SIZE                   # 128  packed output lanes
_RG = _PACK * GROUP_NORM_GROUPS                 # 16   packed group count
_GS = HIDDEN_SIZE // GROUP_NORM_GROUPS          # 16   TRUE group size
_INV_GS = 1.0 / float(_GS)

# ---- tiling policy -----------------------------------------------------------
_TB_MAX = 2048                  # max packed rows per tile (= 8192 logical rows)
_NOGRID_MAX = 256               # packed rows (= 1024 logical rows): below -> no grid
_VMEM_LIMIT = 48 * 1024 * 1024  # <= v7x 64 MiB physical; plenty on v5e/v6e


def _ppmodel_mlp_kernel(x_ref, w1_ref, b1_ref, gstat_ref, gaff_ref, beta_ref,
                        w2_ref, b2_ref, o_ref):
    # dense_in on packed rows: (TB,128) @ (128,256) block-diag + (1,256)
    h = (jnp.dot(x_ref[...], w1_ref[...], preferred_element_type=jnp.float32)
         + b1_ref[...])

    if USE_MLP_NORM:
        # One MXU push for both group statistics: [h | h*h] @ blockdiag(gmap).
        hh = jnp.concatenate([h, h * h], axis=-1)                        # (TB, 2*RH)
        stats = jnp.dot(hh, gstat_ref[...],
                        preferred_element_type=jnp.float32)              # (TB, 2*RG)
        mean = stats[:, :_RG] * _INV_GS
        ex2 = stats[:, _RG:] * _INV_GS
        var = jnp.maximum(ex2 - mean * mean, 0.0)     # clamp: cancellation can go < 0
        rstd = jax.lax.rsqrt(var + GN_EPS)            # (TB, RG)

        # One MXU push broadcasts stats back to channels with gamma folded in:
        # [rstd | mean*rstd] @ blockdiag(gmap_t * gamma) -> [scale | mean*scale].
        sm = jnp.concatenate([rstd, mean * rstd], axis=-1)               # (TB, 2*RG)
        ss = jnp.dot(sm, gaff_ref[...],
                     preferred_element_type=jnp.float32)                 # (TB, 2*RH)
        scale = ss[:, :_RH]                           # gamma * rstd broadcast
        mshift = ss[:, _RH:]                          # gamma * rstd * mean broadcast
        h = h * scale + (beta_ref[...] - mshift)

    # ReLU
    h = jnp.maximum(h, 0.0)

    # dense1_out: (TB,256) @ (256,128) block-diag + (1,128) — lane-dense store.
    o_ref[...] = (jnp.dot(h, w2_ref[...], preferred_element_type=jnp.float32)
                  + b2_ref[...])


def _prep_params(w1, b1, gamma, beta, w2, b2):
    """Build packed / block-diagonal parameters for the lane-dense kernel."""
    f32 = jnp.float32
    eye_p = jnp.eye(_PACK, dtype=f32)
    eye_2 = jnp.eye(2, dtype=f32)
    w1_blk = jnp.kron(eye_p, w1.astype(f32))                         # (RD, RH)
    w2_blk = jnp.kron(eye_p, w2.astype(f32))                         # (RH, RP)
    b1_t = jnp.tile(b1.astype(f32).reshape(1, -1), (1, _PACK))       # (1, RH)
    b2_t = jnp.tile(b2.astype(f32).reshape(1, -1), (1, _PACK))       # (1, RP)
    gamma_t = jnp.tile(gamma.astype(f32).reshape(1, -1), (1, _PACK))  # (1, RH)
    beta_t = jnp.tile(beta.astype(f32).reshape(1, -1), (1, _PACK))    # (1, RH)
    # One-hot group indicator over packed channels (true group size _GS).
    gid = jnp.arange(_RH) // _GS
    gmap = (gid[:, None] == jnp.arange(_RG)[None, :]).astype(f32)    # (RH, RG)
    gstat = jnp.kron(eye_2, gmap)                                    # (2RH, 2RG)
    gaff = jnp.kron(eye_2, gmap.T * gamma_t)                         # (2RG, 2RH)
    return (w1_blk, b1_t, gstat, gaff, beta_t, w2_blk, b2_t)


def _call_nogrid(xp, params):
    """Tiny-batch path: no grid, every operand whole and VMEM-resident."""
    bp = xp.shape[0]
    vmem = pl.BlockSpec(memory_space=pltpu.MemorySpace.VMEM)
    return pl.pallas_call(
        _ppmodel_mlp_kernel,
        out_shape=jax.ShapeDtypeStruct((bp, _RP), jnp.float32),
        in_specs=[vmem] * 8,
        out_specs=vmem,
    )(xp, *params)


def _call_gridded(xp, params, tb):
    """Batch-gridded path: tile packed rows; weights stay VMEM-resident."""
    bp = xp.shape[0]
    grid = bp // tb
    rep = lambda i: (0, 0)   # constant index_map: no per-step weight re-DMA
    w1_blk, b1_t, gstat, gaff, beta_t, w2_blk, b2_t = params
    return pl.pallas_call(
        _ppmodel_mlp_kernel,
        out_shape=jax.ShapeDtypeStruct((bp, _RP), jnp.float32),
        grid=(grid,),
        in_specs=[
            pl.BlockSpec((tb, _RD), lambda i: (i, 0)),
            pl.BlockSpec(w1_blk.shape, rep),
            pl.BlockSpec(b1_t.shape, rep),
            pl.BlockSpec(gstat.shape, rep),
            pl.BlockSpec(gaff.shape, rep),
            pl.BlockSpec(beta_t.shape, rep),
            pl.BlockSpec(w2_blk.shape, rep),
            pl.BlockSpec(b2_t.shape, rep),
        ],
        out_specs=pl.BlockSpec((tb, _RP), lambda i: (i, 0)),
        compiler_params=pltpu.CompilerParams(
            dimension_semantics=("parallel",),   # shards batch tiles across v7x's 2 TCs
            vmem_limit_bytes=_VMEM_LIMIT,
        ),
    )(xp, *params)


def _choose_tile(bp):
    """Packed-row tile: as large as _TB_MAX but keep >= ~4 grid steps."""
    tb = min(_TB_MAX, -(-bp // 4))
    return max(8, ((tb + 7) // 8) * 8)


def ppmodel_mlp(x, w1, b1, gamma, beta, w2, b2):
    """x: (B, INPUT_SIZE) f32 -> (B, PROJECTION_SIZE) f32 (PPModelMLP.forward).

    Linear weights are passed pre-transposed as (in_features, out_features).
    """
    B = x.shape[0]
    params = _prep_params(w1, b1, gamma, beta, w2, b2)

    bp = -(-B // _PACK)                       # packed rows needed (ceil)
    if bp <= _NOGRID_MAX:
        tb = None
    else:
        tb = _choose_tile(bp)
        bp = (-(-bp // tb)) * tb              # round packed rows up to tile multiple
    rows = bp * _PACK
    if rows != B:
        # Zero-pad the batch remainder; padded rows normalize to finite values
        # (var=0 -> rsqrt(eps)) and are sliced off below.
        x = jnp.pad(x, ((0, rows - B), (0, 0)))
    xp = x.reshape(bp, _RD)                   # free row-major view: 4 rows / 128 lanes

    if tb is None:
        outp = _call_nogrid(xp, params)
    else:
        outp = _call_gridded(xp, params, tb)

    return outp.reshape(rows, PROJECTION_SIZE)[:B]


def _reference(x, w1, b1, gamma, beta, w2, b2):
    h = x @ w1 + b1
    if USE_MLP_NORM:
        hg = h.reshape(h.shape[0], GROUP_NORM_GROUPS, -1)
        mean = hg.mean(axis=-1, keepdims=True)
        var = ((hg - mean) ** 2).mean(axis=-1, keepdims=True)
        hn = (hg - mean) / jnp.sqrt(var + GN_EPS)
        h = hn.reshape(h.shape) * gamma + beta
    h = jnp.maximum(h, 0.0)
    return h @ w2 + b2


if __name__ == "__main__":
    key = jax.random.PRNGKey(0)
    kx, k1, kb1, kg, kb, k2, kb2, kxb = jax.random.split(key, 8)

    x = jax.random.normal(kx, (BATCH, INPUT_SIZE), dtype=jnp.float32)

    # Deterministic parameter init (shapes match nn.Linear / nn.GroupNorm).
    w1 = jax.random.normal(k1, (INPUT_SIZE, HIDDEN_SIZE), dtype=jnp.float32) * 0.1
    b1 = jax.random.normal(kb1, (1, HIDDEN_SIZE), dtype=jnp.float32) * 0.1
    gamma = 1.0 + 0.1 * jax.random.normal(kg, (1, HIDDEN_SIZE), dtype=jnp.float32)
    beta = 0.1 * jax.random.normal(kb, (1, HIDDEN_SIZE), dtype=jnp.float32)
    w2 = jax.random.normal(k2, (HIDDEN_SIZE, PROJECTION_SIZE), dtype=jnp.float32) * 0.1
    b2 = jax.random.normal(kb2, (1, PROJECTION_SIZE), dtype=jnp.float32) * 0.1

    # Module-scale run: tiny batch -> no-grid, fully VMEM-resident fused kernel.
    out = jax.block_until_ready(ppmodel_mlp(x, w1, b1, gamma, beta, w2, b2))
    ref = _reference(x, w1, b1, gamma, beta, w2, b2)
    assert out.shape == (BATCH, PROJECTION_SIZE)
    assert jnp.allclose(out, ref, atol=1e-4, rtol=1e-4), "mismatch vs reference (small)"

    # Sanity-check the batch-gridded ("parallel") path, including a ragged batch
    # that exercises the cdiv grid + zero-padding + unpacking.
    B_big = 4133
    x_big = jax.random.normal(kxb, (B_big, INPUT_SIZE), dtype=jnp.float32)
    out_big = jax.block_until_ready(ppmodel_mlp(x_big, w1, b1, gamma, beta, w2, b2))
    ref_big = _reference(x_big, w1, b1, gamma, beta, w2, b2)
    assert out_big.shape == (B_big, PROJECTION_SIZE)
    assert jnp.allclose(out_big, ref_big, atol=1e-4, rtol=1e-4), \
        "mismatch vs reference (gridded)"

    print("KERNEL_OK")
</pallas_src>

<mosaic_0001>
module attributes {stable_mosaic.version = 11 : i64} {
  func.func @_ppmodel_mlp_kernel(%arg0: memref<2x128xf32, #tpu.memory_space<vmem>>, %arg1: memref<128x256xf32, #tpu.memory_space<vmem>>, %arg2: memref<1x256xf32, #tpu.memory_space<vmem>>, %arg3: memref<512x32xf32, #tpu.memory_space<vmem>>, %arg4: memref<32x512xf32, #tpu.memory_space<vmem>>, %arg5: memref<1x256xf32, #tpu.memory_space<vmem>>, %arg6: memref<256x128xf32, #tpu.memory_space<vmem>>, %arg7: memref<1x128xf32, #tpu.memory_space<vmem>>, %arg8: memref<2x128xf32, #tpu.memory_space<vmem>>) attributes {dimension_semantics = [], scalar_prefetch = 0 : i64, scratch_operands = 0 : i64, tpu.core_type = #tpu.core_type<tc>} {
    %c0 = arith.constant 0 : index
    %c0_0 = arith.constant 0 : index
    %0 = vector.load %arg0[%c0, %c0_0] : memref<2x128xf32, #tpu.memory_space<vmem>>, vector<2x128xf32>
    %c0_1 = arith.constant 0 : index
    %c0_2 = arith.constant 0 : index
    %1 = vector.load %arg1[%c0_1, %c0_2] : memref<128x256xf32, #tpu.memory_space<vmem>>, vector<128x256xf32>
    %cst = arith.constant dense<0.000000e+00> : vector<2x256xf32>
    %2 = tpu.matmul %0, %1, %cst {dimension_numbers = #tpu.dot_dimension_numbers<[1], [0], [0], [1], [0, 0, 1, 1], [], []>} : vector<2x128xf32>, vector<128x256xf32>, vector<2x256xf32> -> vector<2x256xf32>
    %c0_3 = arith.constant 0 : index
    %c0_4 = arith.constant 0 : index
    %3 = vector.load %arg2[%c0_3, %c0_4] : memref<1x256xf32, #tpu.memory_space<vmem>>, vector<1x256xf32>
    %4 = vector.broadcast %3 : vector<1x256xf32> to vector<2x256xf32>
    %5 = arith.addf %2, %4 : vector<2x256xf32>
    %6 = arith.mulf %5, %5 : vector<2x256xf32>
    %7 = tpu.concatenate %5, %6 in 1 : vector<2x256xf32>, vector<2x256xf32> -> vector<2x512xf32>
    %c0_5 = arith.constant 0 : index
    %c0_6 = arith.constant 0 : index
    %8 = vector.load %arg3[%c0_5, %c0_6] : memref<512x32xf32, #tpu.memory_space<vmem>>, vector<512x32xf32>
    %cst_7 = arith.constant dense<0.000000e+00> : vector<2x32xf32>
    %9 = tpu.matmul %7, %8, %cst_7 {dimension_numbers = #tpu.dot_dimension_numbers<[1], [0], [0], [1], [0, 0, 1, 1], [], []>} : vector<2x512xf32>, vector<512x32xf32>, vector<2x32xf32> -> vector<2x32xf32>
    %10 = vector.extract_strided_slice %9 {offsets = [0, 0], sizes = [2, 16], strides = [1, 1]} : vector<2x32xf32> to vector<2x16xf32>
    %cst_8 = arith.constant 6.250000e-02 : f32
    %11 = vector.broadcast %cst_8 : f32 to vector<2x16xf32>
    %12 = arith.mulf %10, %11 : vector<2x16xf32>
    %13 = vector.extract_strided_slice %9 {offsets = [0, 16], sizes = [2, 16], strides = [1, 1]} : vector<2x32xf32> to vector<2x16xf32>
    %cst_9 = arith.constant 6.250000e-02 : f32
    %14 = vector.broadcast %cst_9 : f32 to vector<2x16xf32>
    %15 = arith.mulf %13, %14 : vector<2x16xf32>
    %16 = arith.mulf %12, %12 : vector<2x16xf32>
    %17 = arith.subf %15, %16 : vector<2x16xf32>
    %cst_10 = arith.constant 0.000000e+00 : f32
    %18 = vector.broadcast %cst_10 : f32 to vector<2x16xf32>
    %19 = arith.maximumf %17, %18 : vector<2x16xf32>
    %cst_11 = arith.constant 9.99999974E-6 : f32
    %20 = vector.broadcast %cst_11 : f32 to vector<2x16xf32>
    %21 = arith.addf %19, %20 : vector<2x16xf32>
    %22 = math.rsqrt %21 : vector<2x16xf32>
    %23 = arith.mulf %12, %22 : vector<2x16xf32>
    %24 = tpu.concatenate %22, %23 in 1 : vector<2x16xf32>, vector<2x16xf32> -> vector<2x32xf32>
    %c0_12 = arith.constant 0 : index
    %c0_13 = arith.constant 0 : index
    %25 = vector.load %arg4[%c0_12, %c0_13] : memref<32x512xf32, #tpu.memory_space<vmem>>, vector<32x512xf32>
    %cst_14 = arith.constant dense<0.000000e+00> : vector<2x512xf32>
    %26 = tpu.matmul %24, %25, %cst_14 {dimension_numbers = #tpu.dot_dimension_numbers<[1], [0], [0], [1], [0, 0, 1, 1], [], []>} : vector<2x32xf32>, vector<32x512xf32>, vector<2x512xf32> -> vector<2x512xf32>
    %27 = vector.extract_strided_slice %26 {offsets = [0, 0], sizes = [2, 256], strides = [1, 1]} : vector<2x512xf32> to vector<2x256xf32>
    %28 = vector.extract_strided_slice %26 {offsets = [0, 256], sizes = [2, 256], strides = [1, 1]} : vector<2x512xf32> to vector<2x256xf32>
    %29 = arith.mulf %5, %27 : vector<2x256xf32>
    %c0_15 = arith.constant 0 : index
    %c0_16 = arith.constant 0 : index
    %30 = vector.load %arg5[%c0_15, %c0_16] : memref<1x256xf32, #tpu.memory_space<vmem>>, vector<1x256xf32>
    %31 = vector.broadcast %30 : vector<1x256xf32> to vector<2x256xf32>
    %32 = arith.subf %31, %28 : vector<2x256xf32>
    %33 = arith.addf %29, %32 : vector<2x256xf32>
    %cst_17 = arith.constant 0.000000e+00 : f32
    %34 = vector.broadcast %cst_17 : f32 to vector<2x256xf32>
    %35 = arith.maximumf %33, %34 : vector<2x256xf32>
    %c0_18 = arith.constant 0 : index
    %c0_19 = arith.constant 0 : index
    %36 = vector.load %arg6[%c0_18, %c0_19] : memref<256x128xf32, #tpu.memory_space<vmem>>, vector<256x128xf32>
    %cst_20 = arith.constant dense<0.000000e+00> : vector<2x128xf32>
    %37 = tpu.matmul %35, %36, %cst_20 {dimension_numbers = #tpu.dot_dimension_numbers<[1], [0], [0], [1], [0, 0, 1, 1], [], []>} : vector<2x256xf32>, vector<256x128xf32>, vector<2x128xf32> -> vector<2x128xf32>
    %c0_21 = arith.constant 0 : index
    %c0_22 = arith.constant 0 : index
    %38 = vector.load %arg7[%c0_21, %c0_22] : memref<1x128xf32, #tpu.memory_space<vmem>>, vector<1x128xf32>
    %39 = vector.broadcast %38 : vector<1x128xf32> to vector<2x128xf32>
    %40 = arith.addf %37, %39 : vector<2x128xf32>
    %c0_23 = arith.constant 0 : index
    %c0_24 = arith.constant 0 : index
    %41 = vector.load %arg8[%c0_23, %c0_24] : memref<2x128xf32, #tpu.memory_space<vmem>>, vector<2x128xf32>
    tpu.vector_store %arg8[%c0_23, %c0_24], %40 {strides = array<i32>} : memref<2x128xf32, #tpu.memory_space<vmem>>, vector<2x128xf32>,
    return
  }
}

</mosaic_0001>

<llo_original>
// kernel: tpu_custom_call.1
$region0: #{tpu_custom_call.1}
  #allocation0 [shape = 'u32[]', space=smem, size = 0x4, offset = 0x4, fixed_abs, tag = 'smem constant byte address 0x4 - core index']
  #allocation1 [shape = 'u32[72,128]{1,0:T(1,128)}', space=vmem, size = 0x9000, scoped, tag = 'internal scratch']
  %s0 = inlined_call_operand.hbm [shape: f32[2,128], index: 0, kind: input, shape index: {}]
  %s1 = inlined_call_operand.vmem [shape: f32[128,256], index: 1, kind: input, shape index: {}]
  %s2 = inlined_call_operand.hbm [shape: f32[1,256], index: 2, kind: input, shape index: {}]
  %s3 = inlined_call_operand.vmem [shape: f32[512,32], index: 3, kind: input, shape index: {}]
  %s4 = inlined_call_operand.vmem [shape: f32[32,512], index: 4, kind: input, shape index: {}]
  %s5 = inlined_call_operand.hbm [shape: f32[1,256], index: 5, kind: input, shape index: {}]
  %s6 = inlined_call_operand.vmem [shape: f32[256,128], index: 6, kind: input, shape index: {}]
  %s7 = inlined_call_operand.vmem [shape: f32[1,128], index: 7, kind: input, shape index: {}]
  %s8 = inlined_call_operand.hbm [shape: f32[2,128], index: 8, kind: output, shape index: {}]
  %s9 = sld [smem:[#allocation0]]
  $region54: #{tpu_custom_call.1} parent=0
    _
  %s11 = ssub.s32 1, %s9
  %s12 = scalar_select 0, %s11, %s9
  $region1: #{tpu_custom_call.1} parent=0
    #allocation2 [shape = 'u8[1024]{0}', space=vmem, size = 0x400, scoped, tag = 'input window, operand 0, single buffered']
    #allocation3 [shape = 's32[1]{0}', space=sflag, size = 0x4, scoped, tag = 'scoped memory for tpu_custom_call.1']
    #allocation4 [shape = 's32[1]{0}', space=sflag, size = 0x4, scoped, tag = 'scoped memory for tpu_custom_call.1']
    #allocation5 [shape = 'u8[1024]{0}', space=vmem, size = 0x400, scoped, tag = 'input window, operand 2, single buffered']
    #allocation6 [shape = 's32[1]{0}', space=sflag, size = 0x4, scoped, tag = 'scoped memory for tpu_custom_call.1']
    #allocation7 [shape = 'u8[1024]{0}', space=vmem, size = 0x400, scoped, tag = 'input window, operand 5, single buffered']
    #allocation8 [shape = 'u8[1024]{0}', space=vmem, size = 0x400, scoped, tag = 'output window, operand 0, single buffered']
    %13 = vsyncpa [#allocation3], 0
    %14 = vsyncpa [#allocation6], 0
    %15 = vsyncpa [#allocation4], 0
    // Predicated region
    $region2: #{tpu_custom_call.1} parent=1 // pred_check
      _
    $region3: #{tpu_custom_call.1} parent=1 // pred_check_branch
      %17 = sbr.rel (0) target = $region5
    $region4: #{tpu_custom_call.1} parent=1 // pred_region
      %19 = vsyncadd [#allocation3], 0
      %s21 = sshll.u32 %s0, 4
      %s22 = int_to_ptr.hbm [resolvable:$true] %s21
      %s23 = sshll.u32 [#allocation2], 4
      %s24 = int_to_ptr.vmem [resolvable:$true] %s23
      %26 = dma.hbm_to_vmem [thread:$0]  %s22, 32, %s24, [#allocation3]
    $region5: #{tpu_custom_call.1} parent=1 // pred_fallthru
      _
    // Predicated region
    $region6: #{tpu_custom_call.1} parent=1 // pred_check
      _
    $region7: #{tpu_custom_call.1} parent=1 // pred_check_branch
      %28 = sbr.rel (0) target = $region9
    $region8: #{tpu_custom_call.1} parent=1 // pred_region
      _
    $region9: #{tpu_custom_call.1} parent=1 // pred_fallthru
      _
    // Predicated region
    $region10: #{tpu_custom_call.1} parent=1 // pred_check
      _
    $region11: #{tpu_custom_call.1} parent=1 // pred_check_branch
      %30 = sbr.rel (0) target = $region13
    $region12: #{tpu_custom_call.1} parent=1 // pred_region
      %32 = vsyncadd [#allocation6], 0
      %s34 = sshll.u32 %s2, 4
      %s35 = int_to_ptr.hbm [resolvable:$true] %s34
      %s36 = sshll.u32 [#allocation5], 4
      %s37 = int_to_ptr.vmem [resolvable:$true] %s36
      %39 = dma.hbm_to_vmem [thread:$0]  %s35, 32, %s37, [#allocation6]
    $region13: #{tpu_custom_call.1} parent=1 // pred_fallthru
      _
    // Predicated region
    $region14: #{tpu_custom_call.1} parent=1 // pred_check
      _
    $region15: #{tpu_custom_call.1} parent=1 // pred_check_branch
      %41 = sbr.rel (0) target = $region17
    $region16: #{tpu_custom_call.1} parent=1 // pred_region
      _
    $region17: #{tpu_custom_call.1} parent=1 // pred_fallthru
      _
    // Predicated region
    $region18: #{tpu_custom_call.1} parent=1 // pred_check
      _
    $region19: #{tpu_custom_call.1} parent=1 // pred_check_branch
      %43 = sbr.rel (0) target = $region21
    $region20: #{tpu_custom_call.1} parent=1 // pred_region
      _
    $region21: #{tpu_custom_call.1} parent=1 // pred_fallthru
      _
    // Predicated region
    $region22: #{tpu_custom_call.1} parent=1 // pred_check
      _
    $region23: #{tpu_custom_call.1} parent=1 // pred_check_branch
      %45 = sbr.rel (0) target = $region25
    $region24: #{tpu_custom_call.1} parent=1 // pred_region
      %47 = vsyncadd [#allocation6], 0
      %s49 = sshll.u32 %s5, 4
      %s50 = int_to_ptr.hbm [resolvable:$true] %s49
      %s51 = sshll.u32 [#allocation7], 4
      %s52 = int_to_ptr.vmem [resolvable:$true] %s51
      %54 = dma.hbm_to_vmem [thread:$0]  %s50, 32, %s52, [#allocation6]
    $region25: #{tpu_custom_call.1} parent=1 // pred_fallthru
      _
    // Predicated region
    $region26: #{tpu_custom_call.1} parent=1 // pred_check
      _
    $region27: #{tpu_custom_call.1} parent=1 // pred_check_branch
      %56 = sbr.rel (0) target = $region29
    $region28: #{tpu_custom_call.1} parent=1 // pred_region
      _
    $region29: #{tpu_custom_call.1} parent=1 // pred_fallthru
      _
    // Predicated region
    $region30: #{tpu_custom_call.1} parent=1 // pred_check
      _
    $region31: #{tpu_custom_call.1} parent=1 // pred_check_branch
      %58 = sbr.rel (0) target = $region33
    $region32: #{tpu_custom_call.1} parent=1 // pred_region
      _
    $region33: #{tpu_custom_call.1} parent=1 // pred_fallthru
      _
    // Predicated region
    $region34: #{tpu_custom_call.1} parent=1 // pred_check
      _
    $region35: #{tpu_custom_call.1} parent=1 // pred_check_branch
      %60 = sbr.rel (0) target = $region37
    $region36: #{tpu_custom_call.1} parent=1 // pred_region
      %62 = dma.done [#allocation3], 32
    $region37: #{tpu_custom_call.1} parent=1 // pred_fallthru
      _
    // Predicated region
    $region38: #{tpu_custom_call.1} parent=1 // pred_check
      _
    $region39: #{tpu_custom_call.1} parent=1 // pred_check_branch
      %64 = sbr.rel (0) target = $region41
    $region40: #{tpu_custom_call.1} parent=1 // pred_region
      %66 = dma.done [#allocation6], 32
    $region41: #{tpu_custom_call.1} parent=1 // pred_fallthru
      _
    // Predicated region
    $region42: #{tpu_custom_call.1} parent=1 // pred_check
      _
    $region43: #{tpu_custom_call.1} parent=1 // pred_check_branch
      %68 = sbr.rel (0) target = $region45
    $region44: #{tpu_custom_call.1} parent=1 // pred_region
      %70 = dma.done [#allocation6], 32
    $region45: #{tpu_custom_call.1} parent=1 // pred_fallthru
      _
    %v71 = vld [vmem:[#allocation2] sm:$0x3]
    %v72 = vld [vmem:[%s1] sm:$0xff]
    %v73 = vld [vmem:[%s1 + $0x8] sm:$0xff]
    %v74 = vld [vmem:[%s1 + $0x10] sm:$0xff]
    %v75 = vld [vmem:[%s1 + $0x18] sm:$0xff]
    %v76 = vld [vmem:[%s1 + $0x20] sm:$0xff]
    %v77 = vld [vmem:[%s1 + $0x28] sm:$0xff]
    %v78 = vld [vmem:[%s1 + $0x30] sm:$0xff]
    %v79 = vld [vmem:[%s1 + $0x38] sm:$0xff]
    %v80 = vld [vmem:[%s1 + $0x40] sm:$0xff]
    %v81 = vld [vmem:[%s1 + $0x48] sm:$0xff]
    %v82 = vld [vmem:[%s1 + $0x50] sm:$0xff]
    %v83 = vld [vmem:[%s1 + $0x58] sm:$0xff]
    %v84 = vld [vmem:[%s1 + $0x60] sm:$0xff]
    %v85 = vld [vmem:[%s1 + $0x68] sm:$0xff]
    %v86 = vld [vmem:[%s1 + $0x70] sm:$0xff]
    %v87 = vld [vmem:[%s1 + $0x78] sm:$0xff]
    %v88 = vld [vmem:[%s1 + $0x80] sm:$0xff]
    %v89 = vld [vmem:[%s1 + $0x88] sm:$0xff]
    %v90 = vld [vmem:[%s1 + $0x90] sm:$0xff]
    %v91 = vld [vmem:[%s1 + $0x98] sm:$0xff]
    %v92 = vld [vmem:[%s1 + $0xa0] sm:$0xff]
    %v93 = vld [vmem:[%s1 + $0xa8] sm:$0xff]
    %v94 = vld [vmem:[%s1 + $0xb0] sm:$0xff]
    %v95 = vld [vmem:[%s1 + $0xb8] sm:$0xff]
    %v96 = vld [vmem:[%s1 + $0xc0] sm:$0xff]
    %v97 = vld [vmem:[%s1 + $0xc8] sm:$0xff]
    %v98 = vld [vmem:[%s1 + $0xd0] sm:$0xff]
    %v99 = vld [vmem:[%s1 + $0xd8] sm:$0xff]
    %v100 = vld [vmem:[%s1 + $0xe0] sm:$0xff]
    %v101 = vld [vmem:[%s1 + $0xe8] sm:$0xff]
    %v102 = vld [vmem:[%s1 + $0xf0] sm:$0xff]
    %v103 = vld [vmem:[%s1 + $0xf8] sm:$0xff]
    %v104 = vld [vmem:[#allocation5] sm:$0x3]
    %v106 = vperm.slane %v104, 0
    %v107 = vperm.slane %v104, 1
    %110 = vmatpush.msra.mxu0 %v102
    %111 = vmatpush.msra.mxu0 %v100
    %112 = vmatpush.msra.mxu0 %v98
    %113 = vmatpush.msra.mxu0 %v96
    %114 = vmatpush.msra.mxu0 %v94
    %115 = vmatpush.msra.mxu0 %v92
    %116 = vmatpush.msra.mxu0 %v90
    %117 = vmatpush.msra.mxu0 %v88
    %118 = vmatpush.msra.mxu0 %v86
    %119 = vmatpush.msra.mxu0 %v84
    %120 = vmatpush.msra.mxu0 %v82
    %121 = vmatpush.msra.mxu0 %v80
    %122 = vmatpush.msra.mxu0 %v78
    %123 = vmatpush.msra.mxu0 %v76
    %124 = vmatpush.msra.mxu0 %v74
    %125 = vmatpush.msra.mxu0 %v72
    %126 = vmatmul.f32.gmra.mxu0 %v71
    %v127 = vpop.f32.mrf.mxu0
    %v128 = vadd.f32 %v106, %v127
    %129 = vdwg.mxu0
    %130 = vmatpush.msra.mxu0 %v103
    %131 = vmatpush.msra.mxu0 %v101
    %132 = vmatpush.msra.mxu0 %v99
    %133 = vmatpush.msra.mxu0 %v97
    %134 = vmatpush.msra.mxu0 %v95
    %135 = vmatpush.msra.mxu0 %v93
    %136 = vmatpush.msra.mxu0 %v91
    %137 = vmatpush.msra.mxu0 %v89
    %138 = vmatpush.msra.mxu0 %v87
    %139 = vmatpush.msra.mxu0 %v85
    %140 = vmatpush.msra.mxu0 %v83
    %141 = vmatpush.msra.mxu0 %v81
    %142 = vmatpush.msra.mxu0 %v79
    %143 = vmatpush.msra.mxu0 %v77
    %144 = vmatpush.msra.mxu0 %v75
    %145 = vmatpush.msra.mxu0 %v73
    %146 = vmatmul.f32.gmra.mxu0 %v71
    %v147 = vpop.f32.mrf.mxu0
    %v148 = vadd.f32 %v107, %v147
    %149 = vdwg.mxu0
    %v150 = vmul.f32 %v128, %v128
    %v151 = vmul.f32 %v148, %v148
    %v152 = vld [vmem:[%s3] sm:$0xff]
    %v153 = vld [vmem:[%s3 + $0x8] sm:$0xff]
    %v154 = vld [vmem:[%s3 + $0x10] sm:$0xff]
    %v155 = vld [vmem:[%s3 + $0x18] sm:$0xff]
    %v156 = vld [vmem:[%s3 + $0x20] sm:$0xff]
    %v157 = vld [vmem:[%s3 + $0x28] sm:$0xff]
    %v158 = vld [vmem:[%s3 + $0x30] sm:$0xff]
    %v159 = vld [vmem:[%s3 + $0x38] sm:$0xff]
    %v160 = vld [vmem:[%s3 + $0x40] sm:$0xff]
    %v161 = vld [vmem:[%s3 + $0x48] sm:$0xff]
    %v162 = vld [vmem:[%s3 + $0x50] sm:$0xff]
    %v163 = vld [vmem:[%s3 + $0x58] sm:$0xff]
    %v164 = vld [vmem:[%s3 + $0x60] sm:$0xff]
    %v165 = vld [vmem:[%s3 + $0x68] sm:$0xff]
    %v166 = vld [vmem:[%s3 + $0x70] sm:$0xff]
    %v167 = vld [vmem:[%s3 + $0x78] sm:$0xff]
    %v168 = vld [vmem:[%s3 + $0x80] sm:$0xff]
    %v169 = vld [vmem:[%s3 + $0x88] sm:$0xff]
    %v170 = vld [vmem:[%s3 + $0x90] sm:$0xff]
    %v171 = vld [vmem:[%s3 + $0x98] sm:$0xff]
    %v172 = vld [vmem:[%s3 + $0xa0] sm:$0xff]
    %v173 = vld [vmem:[%s3 + $0xa8] sm:$0xff]
    %v174 = vld [vmem:[%s3 + $0xb0] sm:$0xff]
    %v175 = vld [vmem:[%s3 + $0xb8] sm:$0xff]
    %v176 = vld [vmem:[%s3 + $0xc0] sm:$0xff]
    %v177 = vld [vmem:[%s3 + $0xc8] sm:$0xff]
    %v178 = vld [vmem:[%s3 + $0xd0] sm:$0xff]
    %v179 = vld [vmem:[%s3 + $0xd8] sm:$0xff]
    %v180 = vld [vmem:[%s3 + $0xe0] sm:$0xff]
    %v181 = vld [vmem:[%s3 + $0xe8] sm:$0xff]
    %v182 = vld [vmem:[%s3 + $0xf0] sm:$0xff]
    %v183 = vld [vmem:[%s3 + $0xf8] sm:$0xff]
    %v184 = vld [vmem:[%s3 + $0x100] sm:$0xff]
    %v185 = vld [vmem:[%s3 + $0x108] sm:$0xff]
    %v186 = vld [vmem:[%s3 + $0x110] sm:$0xff]
    %v187 = vld [vmem:[%s3 + $0x118] sm:$0xff]
    %v188 = vld [vmem:[%s3 + $0x120] sm:$0xff]
    %v189 = vld [vmem:[%s3 + $0x128] sm:$0xff]
    %v190 = vld [vmem:[%s3 + $0x130] sm:$0xff]
    %v191 = vld [vmem:[%s3 + $0x138] sm:$0xff]
    %v192 = vld [vmem:[%s3 + $0x140] sm:$0xff]
    %v193 = vld [vmem:[%s3 + $0x148] sm:$0xff]
    %v194 = vld [vmem:[%s3 + $0x150] sm:$0xff]
    %v195 = vld [vmem:[%s3 + $0x158] sm:$0xff]
    %v196 = vld [vmem:[%s3 + $0x160] sm:$0xff]
    %v197 = vld [vmem:[%s3 + $0x168] sm:$0xff]
    %v198 = vld [vmem:[%s3 + $0x170] sm:$0xff]
    %v199 = vld [vmem:[%s3 + $0x178] sm:$0xff]
    %v200 = vld [vmem:[%s3 + $0x180] sm:$0xff]
    %v201 = vld [vmem:[%s3 + $0x188] sm:$0xff]
    %v202 = vld [vmem:[%s3 + $0x190] sm:$0xff]
    %v203 = vld [vmem:[%s3 + $0x198] sm:$0xff]
    %v204 = vld [vmem:[%s3 + $0x1a0] sm:$0xff]
    %v205 = vld [vmem:[%s3 + $0x1a8] sm:$0xff]
    %v206 = vld [vmem:[%s3 + $0x1b0] sm:$0xff]
    %v207 = vld [vmem:[%s3 + $0x1b8] sm:$0xff]
    %v208 = vld [vmem:[%s3 + $0x1c0] sm:$0xff]
    %v209 = vld [vmem:[%s3 + $0x1c8] sm:$0xff]
    %v210 = vld [vmem:[%s3 + $0x1d0] sm:$0xff]
    %v211 = vld [vmem:[%s3 + $0x1d8] sm:$0xff]
    %v212 = vld [vmem:[%s3 + $0x1e0] sm:$0xff]
    %v213 = vld [vmem:[%s3 + $0x1e8] sm:$0xff]
    %v214 = vld [vmem:[%s3 + $0x1f0] sm:$0xff]
    %v215 = vld [vmem:[%s3 + $0x1f8] sm:$0xff]
    %216 = vmatpush.msra.mxu0 %v167
    %217 = vmatpush.msra.mxu0 %v166
    %218 = vmatpush.msra.mxu0 %v165
    %219 = vmatpush.msra.mxu0 %v164
    %220 = vmatpush.msra.mxu0 %v163
    %221 = vmatpush.msra.mxu0 %v162
    %222 = vmatpush.msra.mxu0 %v161
    %223 = vmatpush.msra.mxu0 %v160
    %224 = vmatpush.msra.mxu0 %v159
    %225 = vmatpush.msra.mxu0 %v158
    %226 = vmatpush.msra.mxu0 %v157
    %227 = vmatpush.msra.mxu0 %v156
    %228 = vmatpush.msra.mxu0 %v155
    %229 = vmatpush.msra.mxu0 %v154
    %230 = vmatpush.msra.mxu0 %v153
    %231 = vmatpush.msra.mxu0 %v152
    %232 = vmatmul.f32.gmra.mxu0 %v128
    %v233 = vpop.f32.mrf.mxu0
    %v234 = vadd.f32 0.0, %v233
    %235 = vdwg.mxu0
    %236 = vmatpush.msra.mxu0 %v183
    %237 = vmatpush.msra.mxu0 %v182
    %238 = vmatpush.msra.mxu0 %v181
    %239 = vmatpush.msra.mxu0 %v180
    %240 = vmatpush.msra.mxu0 %v179
    %241 = vmatpush.msra.mxu0 %v178
    %242 = vmatpush.msra.mxu0 %v177
    %243 = vmatpush.msra.mxu0 %v176
    %244 = vmatpush.msra.mxu0 %v175
    %245 = vmatpush.msra.mxu0 %v174
    %246 = vmatpush.msra.mxu0 %v173
    %247 = vmatpush.msra.mxu0 %v172
    %248 = vmatpush.msra.mxu0 %v171
    %249 = vmatpush.msra.mxu0 %v170
    %250 = vmatpush.msra.mxu0 %v169
    %251 = vmatpush.msra.mxu0 %v168
    %252 = vmatmul.f32.gmra.mxu0 %v148
    %v253 = vpop.f32.mrf.mxu0
    %v254 = vadd.f32 %v234, %v253
    %255 = vdwg.mxu0
    %256 = vmatpush.msra.mxu0 %v199
    %257 = vmatpush.msra.mxu0 %v198
    %258 = vmatpush.msra.mxu0 %v197
    %259 = vmatpush.msra.mxu0 %v196
    %260 = vmatpush.msra.mxu0 %v195
    %261 = vmatpush.msra.mxu0 %v194
    %262 = vmatpush.msra.mxu0 %v193
    %263 = vmatpush.msra.mxu0 %v192
    %264 = vmatpush.msra.mxu0 %v191
    %265 = vmatpush.msra.mxu0 %v190
    %266 = vmatpush.msra.mxu0 %v189
    %267 = vmatpush.msra.mxu0 %v188
    %268 = vmatpush.msra.mxu0 %v187
    %269 = vmatpush.msra.mxu0 %v186
    %270 = vmatpush.msra.mxu0 %v185
    %271 = vmatpush.msra.mxu0 %v184
    %272 = vmatmul.f32.gmra.mxu0 %v150
    %v273 = vpop.f32.mrf.mxu0
    %v274 = vadd.f32 %v254, %v273
    %275 = vdwg.mxu0
    %276 = vmatpush.msra.mxu0 %v215
    %277 = vmatpush.msra.mxu0 %v214
    %278 = vmatpush.msra.mxu0 %v213
    %279 = vmatpush.msra.mxu0 %v212
    %280 = vmatpush.msra.mxu0 %v211
    %281 = vmatpush.msra.mxu0 %v210
    %282 = vmatpush.msra.mxu0 %v209
    %283 = vmatpush.msra.mxu0 %v208
    %284 = vmatpush.msra.mxu0 %v207
    %285 = vmatpush.msra.mxu0 %v206
    %286 = vmatpush.msra.mxu0 %v205
    %287 = vmatpush.msra.mxu0 %v204
    %288 = vmatpush.msra.mxu0 %v203
    %289 = vmatpush.msra.mxu0 %v202
    %290 = vmatpush.msra.mxu0 %v201
    %291 = vmatpush.msra.mxu0 %v200
    %292 = vmatmul.f32.gmra.mxu0 %v151
    %v293 = vpop.f32.mrf.mxu0
    %v294 = vadd.f32 %v274, %v293
    %295 = vdwg.mxu0
    %v296 = vmul.f32 %v294, 0.0625
    %v297 = vmul.f32 %v296, %v296
    %299 = vrot.lane.b32.xlu0 %v297, 16
    %v300 = vpop.permute.xlu0 %299
    %v302 = vsub.f32 %v296, %v300
    %v303 = vmax.f32 %v302, 0.0
    %v304 = vadd.f32 %v303, 1e-05
    %v305 = vrsqrt.pop %v304
    %v306 = vmul.f32 %v305, %v304
    %v307 = vmul.f32 %v306, %v305
    %v308 = vmul.f32 0.5, %v307
    %v309 = vsub.f32 1.5, %v308
    %v310 = vmul.f32 %v305, %v309
    %vm311 = vweird.f32 %v304
    %vm312 = vweird.f32 %v305
    %vm313 = vmor %vm311, %vm312
    %v314 = vsel %vm313, %v305, %v310
    %316 = vrot.lane.b32.xlu0 %v314, 112
    %v317 = vpop.permute.xlu0 %316
    %v319 = vmul.f32 %v296, %v317
    %321 = vrot.lane.b32.xlu0 %v319, 16
    %v322 = vpop.permute.xlu0 %321
    %vm324 = vcmask 130048
    %v325 = vsel %vm324, %v317, %v322
    %v326 = vld [vmem:[%s4] sm:$0xff]
    %v327 = vld [vmem:[%s4 + $0x8] sm:$0xff]
    %v328 = vld [vmem:[%s4 + $0x10] sm:$0xff]
    %v329 = vld [vmem:[%s4 + $0x18] sm:$0xff]
    %v330 = vld [vmem:[%s4 + $0x20] sm:$0xff]
    %v331 = vld [vmem:[%s4 + $0x28] sm:$0xff]
    %v332 = vld [vmem:[%s4 + $0x30] sm:$0xff]
    %v333 = vld [vmem:[%s4 + $0x38] sm:$0xff]
    %v334 = vld [vmem:[%s4 + $0x40] sm:$0xff]
    %v335 = vld [vmem:[%s4 + $0x48] sm:$0xff]
    %v336 = vld [vmem:[%s4 + $0x50] sm:$0xff]
    %v337 = vld [vmem:[%s4 + $0x58] sm:$0xff]
    %v338 = vld [vmem:[%s4 + $0x60] sm:$0xff]
    %v339 = vld [vmem:[%s4 + $0x68] sm:$0xff]
    %v340 = vld [vmem:[%s4 + $0x70] sm:$0xff]
    %v341 = vld [vmem:[%s4 + $0x78] sm:$0xff]
    %vm342 = vcmask 261120
    %v344 = vsel %vm342, %v325, 0
    %346 = vmatpush.msra.mxu0 0.0
    %347 = vmatpush.msra.mxu0 0.0
    %348 = vmatpush.msra.mxu0 0.0
    %349 = vmatpush.msra.mxu0 0.0
    %350 = vmatpush.msra.mxu0 0.0
    %351 = vmatpush.msra.mxu0 0.0
    %352 = vmatpush.msra.mxu0 0.0
    %353 = vmatpush.msra.mxu0 0.0
    %354 = vmatpush.msra.mxu0 0.0
    %355 = vmatpush.msra.mxu0 0.0
    %356 = vmatpush.msra.mxu0 0.0
    %357 = vmatpush.msra.mxu0 0.0
    %358 = vmatpush.msra.mxu0 %v338
    %359 = vmatpush.msra.mxu0 %v334
    %360 = vmatpush.msra.mxu0 %v330
    %361 = vmatpush.msra.mxu0 %v326
    %362 = vmatmul.f32.gmra.mxu0 %v344
    %v363 = vpop.f32.mrf.mxu0
    %v364 = vadd.f32 0.0, %v363
    %365 = vdwg.mxu0
    %366 = vmatpush.msra.mxu0 0.0
    %367 = vmatpush.msra.mxu0 0.0
    %368 = vmatpush.msra.mxu0 0.0
    %369 = vmatpush.msra.mxu0 0.0
    %370 = vmatpush.msra.mxu0 0.0
    %371 = vmatpush.msra.mxu0 0.0
    %372 = vmatpush.msra.mxu0 0.0
    %373 = vmatpush.msra.mxu0 0.0
    %374 = vmatpush.msra.mxu0 0.0
    %375 = vmatpush.msra.mxu0 0.0
    %376 = vmatpush.msra.mxu0 0.0
    %377 = vmatpush.msra.mxu0 0.0
    %378 = vmatpush.msra.mxu0 %v339
    %379 = vmatpush.msra.mxu0 %v335
    %380 = vmatpush.msra.mxu0 %v331
    %381 = vmatpush.msra.mxu0 %v327
    %382 = vmatmul.f32.gmra.mxu0 %v344
    %v383 = vpop.f32.mrf.mxu0
    %v384 = vadd.f32 0.0, %v383
    %385 = vdwg.mxu0
    %386 = vmatpush.msra.mxu0 0.0
    %387 = vmatpush.msra.mxu0 0.0
    %388 = vmatpush.msra.mxu0 0.0
    %389 = vmatpush.msra.mxu0 0.0
    %390 = vmatpush.msra.mxu0 0.0
    %391 = vmatpush.msra.mxu0 0.0
    %392 = vmatpush.msra.mxu0 0.0
    %393 = vmatpush.msra.mxu0 0.0
    %394 = vmatpush.msra.mxu0 0.0
    %395 = vmatpush.msra.mxu0 0.0
    %396 = vmatpush.msra.mxu0 0.0
    %397 = vmatpush.msra.mxu0 0.0
    %398 = vmatpush.msra.mxu0 %v340
    %399 = vmatpush.msra.mxu0 %v336
    %400 = vmatpush.msra.mxu0 %v332
    %401 = vmatpush.msra.mxu0 %v328
    %402 = vmatmul.f32.gmra.mxu0 %v344
    %v403 = vpop.f32.mrf.mxu0
    %v404 = vadd.f32 0.0, %v403
    %405 = vdwg.mxu0
    %406 = vmatpush.msra.mxu0 0.0
    %407 = vmatpush.msra.mxu0 0.0
    %408 = vmatpush.msra.mxu0 0.0
    %409 = vmatpush.msra.mxu0 0.0
    %410 = vmatpush.msra.mxu0 0.0
    %411 = vmatpush.msra.mxu0 0.0
    %412 = vmatpush.msra.mxu0 0.0
    %413 = vmatpush.msra.mxu0 0.0
    %414 = vmatpush.msra.mxu0 0.0
    %415 = vmatpush.msra.mxu0 0.0
    %416 = vmatpush.msra.mxu0 0.0
    %417 = vmatpush.msra.mxu0 0.0
    %418 = vmatpush.msra.mxu0 %v341
    %419 = vmatpush.msra.mxu0 %v337
    %420 = vmatpush.msra.mxu0 %v333
    %421 = vmatpush.msra.mxu0 %v329
    %422 = vmatmul.f32.gmra.mxu0 %v344
    %v423 = vpop.f32.mrf.mxu0
    %v424 = vadd.f32 0.0, %v423
    %425 = vdwg.mxu0
    %v426 = vmul.f32 %v128, %v364
    %v427 = vmul.f32 %v148, %v384
    %v428 = vld [vmem:[#allocation7] sm:$0x3]
    %v430 = vperm.slane %v428, 0
    %v431 = vperm.slane %v428, 1
    %v434 = vsub.f32 %v430, %v404
    %v435 = vsub.f32 %v431, %v424
    %v436 = vadd.f32 %v426, %v434
    %v437 = vadd.f32 %v427, %v435
    %v438 = vmax.f32 %v436, 0.0
    %v439 = vmax.f32 %v437, 0.0
    %v440 = vld [vmem:[%s6] sm:$0xff]
    %v441 = vld [vmem:[%s6 + $0x8] sm:$0xff]
    %v442 = vld [vmem:[%s6 + $0x10] sm:$0xff]
    %v443 = vld [vmem:[%s6 + $0x18] sm:$0xff]
    %v444 = vld [vmem:[%s6 + $0x20] sm:$0xff]
    %v445 = vld [vmem:[%s6 + $0x28] sm:$0xff]
    %v446 = vld [vmem:[%s6 + $0x30] sm:$0xff]
    %v447 = vld [vmem:[%s6 + $0x38] sm:$0xff]
    %v448 = vld [vmem:[%s6 + $0x40] sm:$0xff]
    %v449 = vld [vmem:[%s6 + $0x48] sm:$0xff]
    %v450 = vld [vmem:[%s6 + $0x50] sm:$0xff]
    %v451 = vld [vmem:[%s6 + $0x58] sm:$0xff]
    %v452 = vld [vmem:[%s6 + $0x60] sm:$0xff]
    %v453 = vld [vmem:[%s6 + $0x68] sm:$0xff]
    %v454 = vld [vmem:[%s6 + $0x70] sm:$0xff]
    %v455 = vld [vmem:[%s6 + $0x78] sm:$0xff]
    %v456 = vld [vmem:[%s6 + $0x80] sm:$0xff]
    %v457 = vld [vmem:[%s6 + $0x88] sm:$0xff]
    %v458 = vld [vmem:[%s6 + $0x90] sm:$0xff]
    %v459 = vld [vmem:[%s6 + $0x98] sm:$0xff]
    %v460 = vld [vmem:[%s6 + $0xa0] sm:$0xff]
    %v461 = vld [vmem:[%s6 + $0xa8] sm:$0xff]
    %v462 = vld [vmem:[%s6 + $0xb0] sm:$0xff]
    %v463 = vld [vmem:[%s6 + $0xb8] sm:$0xff]
    %v464 = vld [vmem:[%s6 + $0xc0] sm:$0xff]
    %v465 = vld [vmem:[%s6 + $0xc8] sm:$0xff]
    %v466 = vld [vmem:[%s6 + $0xd0] sm:$0xff]
    %v467 = vld [vmem:[%s6 + $0xd8] sm:$0xff]
    %v468 = vld [vmem:[%s6 + $0xe0] sm:$0xff]
    %v469 = vld [vmem:[%s6 + $0xe8] sm:$0xff]
    %v470 = vld [vmem:[%s6 + $0xf0] sm:$0xff]
    %v471 = vld [vmem:[%s6 + $0xf8] sm:$0xff]
    %v472 = vld [vmem:[%s7] sm:$0x1]
    %v474 = vperm.slane %v472, 0
    %476 = vmatpush.msra.mxu0 %v455
    %477 = vmatpush.msra.mxu0 %v454
    %478 = vmatpush.msra.mxu0 %v453
    %479 = vmatpush.msra.mxu0 %v452
    %480 = vmatpush.msra.mxu0 %v451
    %481 = vmatpush.msra.mxu0 %v450
    %482 = vmatpush.msra.mxu0 %v449
    %483 = vmatpush.msra.mxu0 %v448
    %484 = vmatpush.msra.mxu0 %v447
    %485 = vmatpush.msra.mxu0 %v446
    %486 = vmatpush.msra.mxu0 %v445
    %487 = vmatpush.msra.mxu0 %v444
    %488 = vmatpush.msra.mxu0 %v443
    %489 = vmatpush.msra.mxu0 %v442
    %490 = vmatpush.msra.mxu0 %v441
    %491 = vmatpush.msra.mxu0 %v440
    %492 = vmatmul.f32.gmra.mxu0 %v438
    %v493 = vpop.f32.mrf.mxu0
    %v494 = vadd.f32 %v474, %v493
    %495 = vdwg.mxu0
    %496 = vmatpush.msra.mxu0 %v471
    %497 = vmatpush.msra.mxu0 %v470
    %498 = vmatpush.msra.mxu0 %v469
    %499 = vmatpush.msra.mxu0 %v468
    %500 = vmatpush.msra.mxu0 %v467
    %501 = vmatpush.msra.mxu0 %v466
    %502 = vmatpush.msra.mxu0 %v465
    %503 = vmatpush.msra.mxu0 %v464
    %504 = vmatpush.msra.mxu0 %v463
    %505 = vmatpush.msra.mxu0 %v462
    %506 = vmatpush.msra.mxu0 %v461
    %507 = vmatpush.msra.mxu0 %v460
    %508 = vmatpush.msra.mxu0 %v459
    %509 = vmatpush.msra.mxu0 %v458
    %510 = vmatpush.msra.mxu0 %v457
    %511 = vmatpush.msra.mxu0 %v456
    %512 = vmatmul.f32.gmra.mxu0 %v439
    %v513 = vpop.f32.mrf.mxu0
    %v514 = vadd.f32 %v494, %v513
    %515 = vdwg.mxu0
    %516 = vst [vmem:[#allocation8] sm:$0x3] %v514
    // Predicated region
    $region46: #{tpu_custom_call.1} parent=1 // pred_check
      _
    $region47: #{tpu_custom_call.1} parent=1 // pred_check_branch
      %518 = sbr.rel (0) target = $region49
    $region48: #{tpu_custom_call.1} parent=1 // pred_region
      %520 = vsyncadd [#allocation4], 0
      %s522 = sshll.u32 [#allocation8], 4
      %s523 = int_to_ptr.vmem [resolvable:$true] %s522
      %s524 = sshll.u32 %s8, 4
      %s525 = int_to_ptr.hbm [resolvable:$true] %s524
      %527 = dma.vmem_to_hbm [thread:$0]  %s523, 32, %s525, [#allocation4]
    $region49: #{tpu_custom_call.1} parent=1 // pred_fallthru
      _
    // Predicated region
    $region50: #{tpu_custom_call.1} parent=1 // pred_check
      _
    $region51: #{tpu_custom_call.1} parent=1 // pred_check_branch
      %529 = sbr.rel (0) target = $region53
    $region52: #{tpu_custom_call.1} parent=1 // pred_region
      %531 = dma.done [#allocation4], 32
    $region53: #{tpu_custom_call.1} parent=1 // pred_fallthru
      _
    %532 = vsyncpa [#allocation3], 1
    %533 = vsyncpa [#allocation6], 1
    %534 = vsyncpa [#allocation4], 1

</llo_original>
